<compile_context>
chip_gen: v7x
topology: tpu7x:2x2x1
jax: 0.10.0
libtpu: 0.0.40
codegen_flags: <defaults>
</compile_context>

<pallas_src>
import functools
import math

import jax
import jax.numpy as jnp
from jax import lax
from jax.experimental import pallas as pl
from jax.experimental.pallas import tpu as pltpu


def _round_up(x, m):
    return ((x + m - 1) // m) * m


def _vmem_capacity_bytes():
    try:
        return int(pltpu.get_tpu_info().vmem_capacity_bytes)
    except Exception:
        return 64 * 1024 * 1024  # conservative (v7x-sized) fallback


def _gcn_kernel(adj_ref, x_ref, w_ref, b_ref, o_ref, acc_ref, *,
                n_nodes, tk, deg_col):
    """Grid = (batch, node-row tile i, node-column reduction tile k)."""
    k = pl.program_id(2)

    @pl.when(k == 0)
    def _init():
        acc_ref[...] = jnp.zeros_like(acc_ref)

    adj = adj_ref[0]        # (tn, tk)        streamed dtype (f32 or bf16)
    x_k = x_ref[0]          # (tk, F_in_pad)  streamed dtype; col deg_col is all-ones

    # Tail handling when tk does not divide N (adj is not padded in HBM): zero
    # the columns past the true node count.  The predicate is all-true on
    # non-tail tiles and the select is hidden under the adj DMA (HBM-bound).
    if n_nodes % tk != 0:
        col = k * tk + lax.broadcasted_iota(jnp.int32, adj.shape, 1)
        adj = jnp.where(col < n_nodes, adj, 0)

    # Partial aggregation A @ [X | 1] over column tiles of A (MXU, f32 acc).
    # The ones column makes acc[:, deg_col] the partial row degree for free.
    acc_ref[...] += jnp.dot(adj, x_k, preferred_element_type=jnp.float32)

    @pl.when(k == pl.num_programs(2) - 1)
    def _finalize():
        acc = acc_ref[...]                              # (tn, F_in_pad), f32
        deg = acc[:, deg_col:deg_col + 1]               # (tn, 1) row degree
        inv_d = 1.0 / deg                               # exact (matches torch: d==0 -> NaN)
        h = acc * inv_d                                 # (tn, F_in_pad)
        out = jnp.dot(h, w_ref[...], preferred_element_type=jnp.float32)
        o_ref[0] = (out + b_ref[...]).astype(o_ref.dtype)


def graph_convolution(x, adj, weight, bias=None, *, stream_dtype=None,
                      tn=None, tk=None):
    """x: [B, N, F_in], adj: [B, N, N], weight: [F_in, F_out], bias: [F_out] or None.

    stream_dtype: optional dtype (e.g. jnp.bfloat16) used to stream adj/x from
    HBM; accumulation and output stay float32.
    """
    B, N, F_in = x.shape
    F_in_w, F_out = weight.shape
    assert F_in_w == F_in, (F_in_w, F_in)
    out_dtype = x.dtype

    stream_adj_dtype = jnp.dtype(stream_dtype) if stream_dtype is not None else adj.dtype
    stream_x_dtype = jnp.dtype(stream_dtype) if stream_dtype is not None else x.dtype

    # Feature padding (lane-dense tiles).  One extra input column is reserved
    # for the all-ones "degree feature".
    F_in_pad = _round_up(F_in + 1, 128)
    F_out_pad = _round_up(F_out, 128)
    deg_col = F_in

    # ---------------- tile selection + VMEM budget ----------------
    cap = _vmem_capacity_bytes()
    budget = min(cap // 2, 40 << 20)

    def _need(tn_, tk_):
        # Double-buffered adj / x / out / weight / bias blocks + acc scratch.
        return (2 * tn_ * tk_ * jnp.dtype(stream_adj_dtype).itemsize
                + 2 * tk_ * F_in_pad * jnp.dtype(stream_x_dtype).itemsize
                + 2 * tn_ * F_out_pad * jnp.dtype(out_dtype).itemsize
                + 2 * F_in_pad * F_out_pad * 4
                + 2 * F_out_pad * 4
                + tn_ * F_in_pad * 4)

    if tn is None:
        tn = N if N <= 512 else 512          # sublane dim: mult of 8 or == full N
    if tk is None:
        tk = N if N <= 2048 else 2048        # lane dim: mult of 128 or == full N
        while _need(tn, tk) > budget and tk > 256 and tk % 256 == 0:
            tk //= 2
    while _need(tn, tk) > budget and tn > 16 and tn % 16 == 0:
        tn //= 2

    n_i = pl.cdiv(N, tn)
    n_k = pl.cdiv(N, tk)
    Ni_pad = n_i * tn     # output node-dim padding (cheap; sliced off)
    Nk_pad = n_k * tk     # x node-dim padding (cheap); adj stays unpadded

    # ---------------- cheap wrapper-side prep (no adj copy) ----------------
    ones = jnp.ones((B, N, 1), dtype=x.dtype)
    x_aug = jnp.concatenate([x, ones], axis=-1)                      # (B, N, F_in+1)
    x_p = jnp.pad(x_aug, ((0, 0), (0, Nk_pad - N), (0, F_in_pad - (F_in + 1))))
    x_p = x_p.astype(stream_x_dtype)

    adj_s = adj.astype(stream_adj_dtype)     # no-op when stream_dtype is None

    w_p = jnp.pad(weight.astype(jnp.float32),
                  ((0, F_in_pad - F_in), (0, F_out_pad - F_out)))
    if bias is None:
        b_p = jnp.zeros((1, F_out_pad), jnp.float32)
    else:
        b_p = jnp.pad(bias.astype(jnp.float32).reshape(1, F_out),
                      ((0, 0), (0, F_out_pad - F_out)))

    # ---------------- compiler hints ----------------
    vmem_limit = int(min(cap * 3 // 4, max(2 * _need(tn, tk), 48 << 20)))
    flops = 2 * B * N * N * F_in_pad + 2 * B * N * F_in_pad * F_out_pad
    bytes_accessed = (adj_s.size * adj_s.dtype.itemsize
                      + B * n_i * Nk_pad * F_in_pad * x_p.dtype.itemsize
                      + w_p.size * 4 + b_p.size * 4
                      + B * Ni_pad * F_out_pad * jnp.dtype(out_dtype).itemsize)
    cost = pl.CostEstimate(flops=int(flops), transcendentals=int(B * Ni_pad),
                           bytes_accessed=int(bytes_accessed))

    kernel = functools.partial(_gcn_kernel, n_nodes=N, tk=tk, deg_col=deg_col)

    out_p = pl.pallas_call(
        kernel,
        out_shape=jax.ShapeDtypeStruct((B, Ni_pad, F_out_pad), out_dtype),
        grid_spec=pltpu.PrefetchScalarGridSpec(
            num_scalar_prefetch=0,
            grid=(B, n_i, n_k),
            in_specs=[
                pl.BlockSpec((1, tn, tk), lambda b, i, k: (b, i, k)),        # adj tile
                pl.BlockSpec((1, tk, F_in_pad), lambda b, i, k: (b, k, 0)),  # x col-slab (+ones)
                pl.BlockSpec((F_in_pad, F_out_pad), lambda b, i, k: (0, 0)), # weight (resident)
                pl.BlockSpec((1, F_out_pad), lambda b, i, k: (0, 0)),        # bias
            ],
            out_specs=pl.BlockSpec((1, tn, F_out_pad), lambda b, i, k: (b, i, 0)),
            scratch_shapes=[pltpu.VMEM((tn, F_in_pad), jnp.float32)],        # A@[X|1] acc
        ),
        compiler_params=pltpu.CompilerParams(
            dimension_semantics=("parallel", "parallel", "arbitrary"),
            vmem_limit_bytes=vmem_limit,
        ),
        cost_estimate=cost,
    )(adj_s, x_p, w_p, b_p)

    return out_p[:, :N, :F_out]


def reference(x, adj, weight, bias):
    support = jnp.matmul(x, weight, precision=lax.Precision.HIGHEST)
    d = jnp.sum(adj, axis=2, keepdims=True)
    out = jnp.matmul(adj / d, support, precision=lax.Precision.HIGHEST)
    return out + bias


def _make_case(key, B, N, F_in, F_out):
    kx, ka, kw, kb = jax.random.split(key, 4)
    x = jax.random.normal(kx, (B, N, F_in), dtype=jnp.float32)
    # Positive adjacency so row-sums are nonzero (weighted graph).
    adj = jax.random.uniform(ka, (B, N, N), dtype=jnp.float32, minval=0.1, maxval=1.0)
    # reset_parameters: U(-stdv, stdv), stdv = 1/sqrt(out_features).
    stdv = 1.0 / math.sqrt(F_out)
    w = jax.random.uniform(kw, (F_in, F_out), dtype=jnp.float32, minval=-stdv, maxval=stdv)
    b = jax.random.uniform(kb, (F_out,), dtype=jnp.float32, minval=-stdv, maxval=stdv)
    return x, adj, w, b


if __name__ == "__main__":
    key = jax.random.PRNGKey(0)
    k1, k2 = jax.random.split(key)

    # 1) Tiny single-tile case (module-scale shapes), exact f32 path.
    x, adj, w, b = _make_case(k1, B=2, N=8, F_in=16, F_out=32)
    out = jax.block_until_ready(graph_convolution(x, adj, w, b))
    ref = reference(x, adj, w, b)
    assert out.shape == (2, 8, 32), out.shape
    err = float(jnp.max(jnp.abs(out - ref)))
    assert jnp.allclose(out, ref, atol=2e-3, rtol=2e-3), err

    # 2) Multi-tile grid (forced small tiles) to exercise the k-reduction
    #    accumulator and row tiling; still exact f32 streaming.
    x2, adj2, w2, b2 = _make_case(k2, B=1, N=256, F_in=48, F_out=40)
    out2 = jax.block_until_ready(graph_convolution(x2, adj2, w2, b2, tn=128, tk=128))
    ref2 = reference(x2, adj2, w2, b2)
    assert out2.shape == (1, 256, 40), out2.shape
    err2 = float(jnp.max(jnp.abs(out2 - ref2)))
    assert jnp.allclose(out2, ref2, atol=2e-3, rtol=2e-3), err2

    # 3) bf16-streamed adj/x (halves the dominant HBM traffic); f32 accumulation.
    out3 = jax.block_until_ready(
        graph_convolution(x2, adj2, w2, b2, tn=128, tk=128, stream_dtype=jnp.bfloat16))
    err3 = float(jnp.max(jnp.abs(out3 - ref2)))
    assert jnp.allclose(out3, ref2, atol=2e-2, rtol=2e-2), err3

    print("KERNEL_OK")
</pallas_src>

<mosaic_0001>
module attributes {stable_mosaic.version = 11 : i64} {
  func.func @_gcn_kernel(%arg0: i32, %arg1: i32, %arg2: i32, %arg3: memref<1x8x8xf32, #tpu.memory_space<vmem>>, %arg4: memref<1x8x128xf32, #tpu.memory_space<vmem>>, %arg5: memref<128x128xf32, #tpu.memory_space<vmem>>, %arg6: memref<1x128xf32, #tpu.memory_space<vmem>>, %arg7: memref<1x8x128xf32, #tpu.memory_space<vmem>>, %arg8: memref<8x128xf32, #tpu.memory_space<vmem>>) attributes {dimension_semantics = [#tpu.dimension_semantics<parallel>, #tpu.dimension_semantics<parallel>, #tpu.dimension_semantics<arbitrary>], iteration_bounds = array<i64: 2, 1, 1>, scalar_prefetch = 0 : i64, scratch_operands = 1 : i64, tpu.core_type = #tpu.core_type<tc>, window_params = [{transform_indices = @transform_0, window_bounds = array<i64: 1, 8, 8>}, {transform_indices = @transform_1, window_bounds = array<i64: 1, 8, 128>}, {pipeline_mode = #tpu.pipeline_mode<synchronous>, transform_indices = @transform_2, window_bounds = array<i64: 128, 128>}, {pipeline_mode = #tpu.pipeline_mode<synchronous>, transform_indices = @transform_3, window_bounds = array<i64: 1, 128>}, {transform_indices = @transform_4, window_bounds = array<i64: 1, 8, 128>}]} {
    %c0_i32 = arith.constant 0 : i32
    %0 = arith.cmpi eq, %arg2, %c0_i32 : i32
    %1 = arith.extui %0 : i1 to i32
    %c0_i32_0 = arith.constant 0 : i32
    %2 = arith.cmpi ne, %1, %c0_i32_0 : i32
    scf.if %2 {
      %cst_12 = arith.constant 0.000000e+00 : f32
      %14 = vector.broadcast %cst_12 : f32 to vector<8x128xf32>
      %c0_13 = arith.constant 0 : index
      %c0_14 = arith.constant 0 : index
      %15 = vector.load %arg8[%c0_13, %c0_14] : memref<8x128xf32, #tpu.memory_space<vmem>>, vector<8x128xf32>
      tpu.vector_store %arg8[%c0_13, %c0_14], %14 {strides = array<i32>} : memref<8x128xf32, #tpu.memory_space<vmem>>, vector<8x128xf32>,
    } else {
    }
    %c0 = arith.constant 0 : index
    %c0_1 = arith.constant 0 : index
    %c0_2 = arith.constant 0 : index
    %3 = vector.load %arg3[%c0, %c0_1, %c0_2] : memref<1x8x8xf32, #tpu.memory_space<vmem>>, vector<1x8x8xf32>
    %4 = vector.shape_cast %3 : vector<1x8x8xf32> to vector<8x8xf32>
    %c0_3 = arith.constant 0 : index
    %c0_4 = arith.constant 0 : index
    %c0_5 = arith.constant 0 : index
    %5 = vector.load %arg4[%c0_3, %c0_4, %c0_5] : memref<1x8x128xf32, #tpu.memory_space<vmem>>, vector<1x8x128xf32>
    %6 = vector.shape_cast %5 : vector<1x8x128xf32> to vector<8x128xf32>
    %c0_6 = arith.constant 0 : index
    %c0_7 = arith.constant 0 : index
    %7 = vector.load %arg8[%c0_6, %c0_7] : memref<8x128xf32, #tpu.memory_space<vmem>>, vector<8x128xf32>
    %cst = arith.constant dense<0.000000e+00> : vector<8x128xf32>
    %8 = tpu.matmul %4, %6, %cst {dimension_numbers = #tpu.dot_dimension_numbers<[1], [0], [0], [1], [0, 0, 1, 1], [], []>} : vector<8x8xf32>, vector<8x128xf32>, vector<8x128xf32> -> vector<8x128xf32>
    %9 = arith.addf %7, %8 : vector<8x128xf32>
    %c0_8 = arith.constant 0 : index
    %c0_9 = arith.constant 0 : index
    %10 = vector.load %arg8[%c0_8, %c0_9] : memref<8x128xf32, #tpu.memory_space<vmem>>, vector<8x128xf32>
    tpu.vector_store %arg8[%c0_8, %c0_9], %9 {strides = array<i32>} : memref<8x128xf32, #tpu.memory_space<vmem>>, vector<8x128xf32>,
    %c0_i32_10 = arith.constant 0 : i32
    %11 = arith.cmpi eq, %arg2, %c0_i32_10 : i32
    %12 = arith.extui %11 : i1 to i32
    %c0_i32_11 = arith.constant 0 : i32
    %13 = arith.cmpi ne, %12, %c0_i32_11 : i32
    scf.if %13 {
      %c0_12 = arith.constant 0 : index
      %c0_13 = arith.constant 0 : index
      %14 = vector.load %arg8[%c0_12, %c0_13] : memref<8x128xf32, #tpu.memory_space<vmem>>, vector<8x128xf32>
      %15 = vector.extract_strided_slice %14 {offsets = [0, 16], sizes = [8, 1], strides = [1, 1]} : vector<8x128xf32> to vector<8x1xf32>
      %cst_14 = arith.constant 1.000000e+00 : f32
      %16 = vector.broadcast %cst_14 : f32 to vector<8x1xf32>
      %17 = arith.divf %16, %15 : vector<8x1xf32>
      %18 = vector.broadcast %17 : vector<8x1xf32> to vector<8x128xf32>
      %19 = arith.mulf %14, %18 : vector<8x128xf32>
      %c0_15 = arith.constant 0 : index
      %c0_16 = arith.constant 0 : index
      %20 = vector.load %arg5[%c0_15, %c0_16] : memref<128x128xf32, #tpu.memory_space<vmem>>, vector<128x128xf32>
      %cst_17 = arith.constant dense<0.000000e+00> : vector<8x128xf32>
      %21 = tpu.matmul %19, %20, %cst_17 {dimension_numbers = #tpu.dot_dimension_numbers<[1], [0], [0], [1], [0, 0, 1, 1], [], []>} : vector<8x128xf32>, vector<128x128xf32>, vector<8x128xf32> -> vector<8x128xf32>
      %c0_18 = arith.constant 0 : index
      %c0_19 = arith.constant 0 : index
      %22 = vector.load %arg6[%c0_18, %c0_19] : memref<1x128xf32, #tpu.memory_space<vmem>>, vector<1x128xf32>
      %23 = vector.broadcast %22 : vector<1x128xf32> to vector<8x128xf32>
      %24 = arith.addf %21, %23 : vector<8x128xf32>
      %c0_20 = arith.constant 0 : index
      %c0_21 = arith.constant 0 : index
      %c0_22 = arith.constant 0 : index
      %25 = vector.load %arg7[%c0_20, %c0_21, %c0_22] : memref<1x8x128xf32, #tpu.memory_space<vmem>>, vector<1x8x128xf32>
      %26 = vector.shape_cast %25 : vector<1x8x128xf32> to vector<8x128xf32>
      %27 = vector.shape_cast %24 : vector<8x128xf32> to vector<1x8x128xf32>
      tpu.vector_store %arg7[%c0_20, %c0_21, %c0_22], %27 {strides = array<i32>} : memref<1x8x128xf32, #tpu.memory_space<vmem>>, vector<1x8x128xf32>,
    } else {
    }
    return
  }
  func.func @transform_0(%arg0: i32, %arg1: i32, %arg2: i32) -> (i32, i32, i32) {
    %c0_i32 = arith.constant 0 : i32
    return %arg0, %arg1, %arg2 : i32, i32, i32
  }
  func.func @transform_1(%arg0: i32, %arg1: i32, %arg2: i32) -> (i32, i32, i32) {
    %c0_i32 = arith.constant 0 : i32
    %c0_i32_0 = arith.constant 0 : i32
    return %arg0, %arg2, %c0_i32 : i32, i32, i32
  }
  func.func @transform_2(%arg0: i32, %arg1: i32, %arg2: i32) -> (i32, i32) {
    %c0_i32 = arith.constant 0 : i32
    %c0_i32_0 = arith.constant 0 : i32
    %c0_i32_1 = arith.constant 0 : i32
    return %c0_i32, %c0_i32_0 : i32, i32
  }
  func.func @transform_3(%arg0: i32, %arg1: i32, %arg2: i32) -> (i32, i32) {
    %c0_i32 = arith.constant 0 : i32
    %c0_i32_0 = arith.constant 0 : i32
    %c0_i32_1 = arith.constant 0 : i32
    return %c0_i32, %c0_i32_0 : i32, i32
  }
  func.func @transform_4(%arg0: i32, %arg1: i32, %arg2: i32) -> (i32, i32, i32) {
    %c0_i32 = arith.constant 0 : i32
    %c0_i32_0 = arith.constant 0 : i32
    return %arg0, %arg1, %c0_i32 : i32, i32, i32
  }
}

</mosaic_0001>

<llo_original>
// kernel: tpu_custom_call.1
$region0: #{tpu_custom_call.1}
  #allocation0 [shape = 'u32[]', space=smem, size = 0x4, offset = 0x4, fixed_abs, tag = 'smem constant byte address 0x4 - core index']
  #allocation1 [shape = 'u32[144,128]{1,0:T(1,128)}', space=vmem, size = 0x12000, scoped, tag = 'internal scratch']
  #allocation2 [shape = 'f32[8,128]{1,0:T(8,128)}', space=vmem, size = 0x1000, scoped, tag = 'scratch operand']
  %s0 = inlined_call_operand.hbm [shape: f32[2,8,8], index: 0, kind: input, shape index: {}]
  %s1 = inlined_call_operand.hbm [shape: f32[2,8,128], index: 1, kind: input, shape index: {}]
  %s2 = inlined_call_operand.hbm [shape: f32[128,128], index: 2, kind: input, shape index: {}]
  %s3 = inlined_call_operand.vmem [shape: f32[1,128], index: 3, kind: input, shape index: {}]
  %s4 = inlined_call_operand.hbm [shape: f32[2,8,128], index: 4, kind: output, shape index: {}]
  %s5 = sld [smem:[#allocation0]]
  $region69: #{tpu_custom_call.1} parent=0
    _
  %s7 = ssub.s32 1, %s5
  %s8 = scalar_select 0, %s7, %s5
  $region1: #{tpu_custom_call.1} parent=0
    #allocation3 [shape = 'u8[8192]{0}', space=vmem, size = 0x2000, scoped, tag = 'input window, operand 0']
    #allocation4 [shape = 's32[2]{0}', space=sflag, size = 0x8, scoped, tag = 'scoped memory for tpu_custom_call.1']
    #allocation5 [shape = 's32[2]{0}', space=sflag, size = 0x8, scoped, tag = 'scoped memory for tpu_custom_call.1']
    #allocation6 [shape = 'u8[8192]{0}', space=vmem, size = 0x2000, scoped, tag = 'input window, operand 1']
    #allocation7 [shape = 's32[2]{0}', space=sflag, size = 0x8, scoped, tag = 'scoped memory for tpu_custom_call.1']
    #allocation8 [shape = 'u8[65536]{0}', space=vmem, size = 0x10000, scoped, tag = 'input window, operand 2, single buffered']
    #allocation9 [shape = 'u8[8192]{0}', space=vmem, size = 0x2000, scoped, tag = 'output window, operand 0']
    %9 = vsyncpa [#allocation4], 0
    %s10 = scalar_lea.sflag [#allocation4], 1
    %11 = vsyncpa %s10, 0
    %12 = vsyncpa [#allocation7], 0
    %s13 = scalar_lea.sflag [#allocation7], 1
    %14 = vsyncpa %s13, 0
    %15 = vsyncpa [#allocation5], 0
    %s16 = scalar_lea.sflag [#allocation5], 1
    %17 = vsyncpa %s16, 0
    loop: start=0, step=1, limit=4
    $region2: #{tpu_custom_call.1} parent=1 // loop_pre_header
      _
    $region3: #{tpu_custom_call.1} parent=1 // loop_header
      %s19 = sphi 0, %s23
      %p20 = scmp.ge.s32.totalorder %s19, 4
      %s26 = sphi 0, %s45
      %s27 = sphi 0, %s41
      %s28 = sphi 0, %s37
      %s29 = sphi 0, %s26
      %s30 = sphi 0, %s27
      %s31 = sphi 0, %s28
      %s32 = sphi 0, %s29
      %s33 = sphi 0, %s30
      %s34 = sphi 0, %s31
      %s52 = sphi 0, %s54
      %s55 = sphi 0, %s52
      %s56 = sphi 0, %s55
      %s72 = sphi 0, %s56
      %s80 = sphi 0, %s82
      %s83 = sphi 0, %s80
      %s84 = sphi 0, %s83
      %s100 = sphi 0, %s84
      %s104 = sphi 0, %s104
      %s106 = sphi 0, %s104
      %s107 = sphi 0, %s106
      %s121 = sphi 0, %s107
      %s125 = sphi 0, %s125
      %s127 = sphi 0, %s125
      %s128 = sphi 0, %s127
      %s142 = sphi 0, %s128
      %s150 = sphi 0, %s152
      %s153 = sphi 0, %s150
      %s154 = sphi 0, %s153
      %s170 = sphi 0, %s154
    $region4: #{tpu_custom_call.1} parent=1 // loop_header_branch
      %22 = sbr.rel (%p20) target = $region8
    $region5: #{tpu_custom_call.1} parent=1 // loop_body
      %s24 = ssub.s32 %s19, 1
      %s25 = ssub.s32 %s19, 2
      %s35 = sadd.s32 1, %s28
      %p36 = scmp.ge.s32.totalorder %s35, 1
      %s37 = scalar_select %p36, 0, %s35
      %s38 = sadd.s32 1, %s27
      %s39 = scalar_select %p36, %s38, %s27
      %p40 = scmp.ge.s32.totalorder %s39, 1
      %s41 = scalar_select %p40, 0, %s39
      %s42 = sadd.s32 1, %s26
      %s43 = scalar_select %p40, %s42, %s26
      %p44 = scmp.ge.s32.totalorder %s43, 2
      %s45 = scalar_select %p44, 0, %s43
      %s46 = ssub.s32 %s26, %s45
      %s47 = ssub.s32 %s27, %s41
      %s48 = sor.u32 %s46, %s47
      %s49 = ssub.s32 %s28, %s37
      %s50 = sor.u32 %s48, %s49
      %p51 = scmp.eq.s32.totalorder %s50, 0
      %s53 = sadd.s32 %s52, 1
      %s54 = scalar_select %p51, %s52, %s53
      %p57 = pneg %p51
      %p58 = scmp.eq.s32.totalorder %s19, 1
      %p59 = por %p57, %p58
      %p60 = scmp.ne.s32.totalorder %s52, %s55
      %p61 = scmp.eq.s32.totalorder %s19, 0
      %p62 = por %p60, %p61
      %p63 = scmp.ne.s32.totalorder %s52, %s55
      %p64 = scmp.eq.s32.totalorder %s24, 1
      %p65 = por %p63, %p64
      %p66 = scmp.ne.s32.totalorder %s55, %s56
      %p67 = scmp.eq.s32.totalorder %s24, 0
      %p68 = por %p66, %p67
      %p69 = scmp.ne.s32.totalorder %s55, %s56
      %p70 = scmp.eq.s32.totalorder %s25, 1
      %p71 = por %p69, %p70
      %p73 = scmp.ne.s32.totalorder %s56, %s72
      %p74 = scmp.eq.s32.totalorder %s25, 0
      %p75 = por %p73, %p74
      %s76 = ssub.s32 %s26, %s45
      %s77 = ssub.s32 %s28, %s37
      %s78 = sor.u32 %s76, %s77
      %p79 = scmp.eq.s32.totalorder %s78, 0
      %s81 = sadd.s32 %s80, 1
      %s82 = scalar_select %p79, %s80, %s81
      %p85 = pneg %p79
      %p86 = scmp.eq.s32.totalorder %s19, 1
      %p87 = por %p85, %p86
      %p88 = scmp.ne.s32.totalorder %s80, %s83
      %p89 = scmp.eq.s32.totalorder %s19, 0
      %p90 = por %p88, %p89
      %p91 = scmp.ne.s32.totalorder %s80, %s83
      %p92 = scmp.eq.s32.totalorder %s24, 1
      %p93 = por %p91, %p92
      %p94 = scmp.ne.s32.totalorder %s83, %s84
      %p95 = scmp.eq.s32.totalorder %s24, 0
      %p96 = por %p94, %p95
      %p97 = scmp.ne.s32.totalorder %s83, %s84
      %p98 = scmp.eq.s32.totalorder %s25, 1
      %p99 = por %p97, %p98
      %p101 = scmp.ne.s32.totalorder %s84, %s100
      %p102 = scmp.eq.s32.totalorder %s25, 0
      %p103 = por %p101, %p102
      %s105 = sadd.s32 %s104, 1
      %p108 = scmp.eq.s32.totalorder %s19, 1
      %p109 = scmp.ne.s32.totalorder %s104, %s106
      %p110 = scmp.eq.s32.totalorder %s19, 0
      %p111 = por %p109, %p110
      %p112 = scmp.ne.s32.totalorder %s104, %s106
      %p113 = scmp.eq.s32.totalorder %s24, 1
      %p114 = por %p112, %p113
      %p115 = scmp.ne.s32.totalorder %s106, %s107
      %p116 = scmp.eq.s32.totalorder %s24, 0
      %p117 = por %p115, %p116
      %p118 = scmp.ne.s32.totalorder %s106, %s107
      %p119 = scmp.eq.s32.totalorder %s25, 1
      %p120 = por %p118, %p119
      %p122 = scmp.ne.s32.totalorder %s107, %s121
      %p123 = scmp.eq.s32.totalorder %s25, 0
      %p124 = por %p122, %p123
      %s126 = sadd.s32 %s125, 1
      %p129 = scmp.eq.s32.totalorder %s19, 1
      %p130 = scmp.ne.s32.totalorder %s125, %s127
      %p131 = scmp.eq.s32.totalorder %s19, 0
      %p132 = por %p130, %p131
      %p133 = scmp.ne.s32.totalorder %s125, %s127
      %p134 = scmp.eq.s32.totalorder %s24, 1
      %p135 = por %p133, %p134
      %p136 = scmp.ne.s32.totalorder %s127, %s128
      %p137 = scmp.eq.s32.totalorder %s24, 0
      %p138 = por %p136, %p137
      %p139 = scmp.ne.s32.totalorder %s127, %s128
      %p140 = scmp.eq.s32.totalorder %s25, 1
      %p141 = por %p139, %p140
      %p143 = scmp.ne.s32.totalorder %s128, %s142
      %p144 = scmp.eq.s32.totalorder %s25, 0
      %p145 = por %p143, %p144
      %s146 = ssub.s32 %s26, %s45
      %s147 = ssub.s32 %s27, %s41
      %s148 = sor.u32 %s146, %s147
      %p149 = scmp.eq.s32.totalorder %s148, 0
      %s151 = sadd.s32 %s150, 1
      %s152 = scalar_select %p149, %s150, %s151
      %p155 = pneg %p149
      %p156 = scmp.eq.s32.totalorder %s19, 1
      %p157 = por %p155, %p156
      %p158 = scmp.ne.s32.totalorder %s150, %s153
      %p159 = scmp.eq.s32.totalorder %s19, 0
      %p160 = por %p158, %p159
      %p161 = scmp.ne.s32.totalorder %s150, %s153
      %p162 = scmp.eq.s32.totalorder %s24, 1
      %p163 = por %p161, %p162
      %p164 = scmp.ne.s32.totalorder %s153, %s154
      %p165 = scmp.eq.s32.totalorder %s24, 0
      %p166 = por %p164, %p165
      %p167 = scmp.ne.s32.totalorder %s153, %s154
      %p168 = scmp.eq.s32.totalorder %s25, 1
      %p169 = por %p167, %p168
      %p171 = scmp.ne.s32.totalorder %s154, %s170
      %p172 = scmp.eq.s32.totalorder %s25, 0
      %p173 = por %p171, %p172
      %p174 = scmp.le.s32.totalorder 1, %s19
      %p175 = scmp.lt.s32.totalorder %s19, 3
      %p176 = pnand %p174, %p175
      %p177 = pneg %p176
      // Predicated region
      $region9: #{tpu_custom_call.1} parent=5 // pred_check
        _
      $region10: #{tpu_custom_call.1} parent=5 // pred_check_branch
        %179 = sbr.rel (%p176) target = $region12
      $region11: #{tpu_custom_call.1} parent=5 // pred_region
        %s180 = ssub.s32 %s19, 1
        // Predicated region
        $region13: #{tpu_custom_call.1} parent=11 // pred_check
          %p181 = pneg %p117
        $region14: #{tpu_custom_call.1} parent=11 // pred_check_branch
          %183 = sbr.rel (%p181) target = $region16
        $region15: #{tpu_custom_call.1} parent=11 // pred_region
          %s185 = ssub.s32 2048, 2048
          %186 = vsyncadd [#allocation7], %s185
          %s187 = sshll.u32 [#allocation8], 4
          %s188 = int_to_ptr.vmem [resolvable:$true] %s187
          %193 = dma.hbm_to_vmem [thread:$0]  %s2, 2048, %s188, [#allocation7], 128, 128, 8
        $region16: #{tpu_custom_call.1} parent=11 // pred_fallthru
          _
        // Predicated region
        $region17: #{tpu_custom_call.1} parent=11 // pred_check
          %p194 = pneg %p138
        $region18: #{tpu_custom_call.1} parent=11 // pred_check_branch
          %196 = sbr.rel (%p194) target = $region20
        $region19: #{tpu_custom_call.1} parent=11 // pred_region
          _
        $region20: #{tpu_custom_call.1} parent=11 // pred_fallthru
          _
      $region12: #{tpu_custom_call.1} parent=5 // pred_fallthru
        _
      %p197 = scmp.lt.s32.totalorder %s19, 2
      // Predicated region
      $region21: #{tpu_custom_call.1} parent=5 // pred_check
        %p198 = pneg %p197
      $region22: #{tpu_custom_call.1} parent=5 // pred_check_branch
        %200 = sbr.rel (%p198) target = $region24
      $region23: #{tpu_custom_call.1} parent=5 // pred_region
        // Predicated region
        $region25: #{tpu_custom_call.1} parent=23 // pred_check
          %p201 = pneg %p62
        $region26: #{tpu_custom_call.1} parent=23 // pred_check_branch
          %203 = sbr.rel (%p201) target = $region28
        $region27: #{tpu_custom_call.1} parent=23 // pred_region
          %s204 = sand.u32 %s52, 1
          %s205 = scalar_lea.sflag [#allocation4], %s204
          %s206 = sand.u32 %s52, 1
          %s207 = smul.addr %s206, 8
          %s208 = scalar_lea.vmem [#allocation3], %s207
          %s210 = ssub.s32 128, 128
          %211 = vsyncadd %s205, %s210
          %s212 = sadd.s32 %s28, %s27
          %s213 = sadd.s32 %s212, %s26
          %s214 = smul.addr %s213, 128
          %s215 = scalar_lea.hbm %s0, %s214
          %s217 = sshll.u32 %s208, 4
          %s218 = int_to_ptr.vmem [resolvable:$true] %s217
          %220 = dma.hbm_to_vmem [thread:$0]  %s215, 128, %s218, %s205
        $region28: #{tpu_custom_call.1} parent=23 // pred_fallthru
          _
        // Predicated region
        $region29: #{tpu_custom_call.1} parent=23 // pred_check
          %p221 = pneg %p90
        $region30: #{tpu_custom_call.1} parent=23 // pred_check_branch
          %223 = sbr.rel (%p221) target = $region32
        $region31: #{tpu_custom_call.1} parent=23 // pred_region
          %s224 = sand.u32 %s19, 1
          %s225 = scalar_lea.sflag [#allocation7], %s224
          %s226 = sand.u32 %s80, 1
          %s227 = smul.addr %s226, 8
          %s228 = scalar_lea.vmem [#allocation6], %s227
          %s230 = ssub.s32 128, 128
          %231 = vsyncadd %s225, %s230
          %s232 = sadd.s32 %s28, %s26
          %s233 = smul.addr %s232, 128
          %s234 = scalar_lea.hbm %s1, %s233
          %s236 = sshll.u32 %s228, 4
          %s237 = int_to_ptr.vmem [resolvable:$true] %s236
          %239 = dma.hbm_to_vmem [thread:$0]  %s234, 128, %s237, %s225
        $region32: #{tpu_custom_call.1} parent=23 // pred_fallthru
          _
      $region24: #{tpu_custom_call.1} parent=5 // pred_fallthru
        _
      %p240 = scmp.le.s32.totalorder 1, %s19
      %p241 = scmp.lt.s32.totalorder %s19, 3
      %p242 = pnand %p240, %p241
      %p243 = pneg %p242
      // Predicated region
      $region33: #{tpu_custom_call.1} parent=5 // pred_check
        _
      $region34: #{tpu_custom_call.1} parent=5 // pred_check_branch
        %245 = sbr.rel (%p242) target = $region36
      $region35: #{tpu_custom_call.1} parent=5 // pred_region
        %s246 = ssub.s32 %s19, 1
        %s247 = sand.u32 %s55, 1
        %s248 = scalar_lea.sflag [#allocation4], %s247
        %s249 = sand.u32 %s55, 1
        %s250 = smul.addr %s249, 8
        %s251 = scalar_lea.vmem [#allocation3], %s250
        // Predicated region
        $region37: #{tpu_custom_call.1} parent=35 // pred_check
          %p252 = pneg %p68
        $region38: #{tpu_custom_call.1} parent=35 // pred_check_branch
          %254 = sbr.rel (%p252) target = $region40
        $region39: #{tpu_custom_call.1} parent=35 // pred_region
          %255 = dma.done %s248, 128
        $region40: #{tpu_custom_call.1} parent=35 // pred_fallthru
          _
        %s256 = sand.u32 %s24, 1
        %s257 = scalar_lea.sflag [#allocation7], %s256
        %s258 = sand.u32 %s83, 1
        %s259 = smul.addr %s258, 8
        %s260 = scalar_lea.vmem [#allocation6], %s259
        // Predicated region
        $region41: #{tpu_custom_call.1} parent=35 // pred_check
          %p261 = pneg %p96
        $region42: #{tpu_custom_call.1} parent=35 // pred_check_branch
          %263 = sbr.rel (%p261) target = $region44
        $region43: #{tpu_custom_call.1} parent=35 // pred_region
          %264 = dma.done %s257, 128
        $region44: #{tpu_custom_call.1} parent=35 // pred_fallthru
          _
        // Predicated region
        $region45: #{tpu_custom_call.1} parent=35 // pred_check
          %p265 = pneg %p117
        $region46: #{tpu_custom_call.1} parent=35 // pred_check_branch
          %267 = sbr.rel (%p265) target = $region48
        $region47: #{tpu_custom_call.1} parent=35 // pred_region
          %268 = dma.done [#allocation7], 2048
        $region48: #{tpu_custom_call.1} parent=35 // pred_fallthru
          _
        %s269 = sand.u32 %s55, 1
        %s270 = scalar_lea.sflag [#allocation4], %s269
        %s271 = sand.u32 %s55, 1
        %s272 = smul.addr %s271, 8
        %s273 = scalar_lea.vmem [#allocation3], %s272
        %p274 = pneg %p68
        %p275 = pneg %p65
        %s276 = sand.u32 %s24, 1
        %s277 = scalar_lea.sflag [#allocation7], %s276
        %s278 = sand.u32 %s83, 1
        %s279 = smul.addr %s278, 8
        %s280 = scalar_lea.vmem [#allocation6], %s279
        %p281 = pneg %p96
        %p282 = pneg %p93
        %p283 = pneg %p117
        %p284 = pneg %p114
        %p285 = pneg %p138
        %p286 = pneg %p135
        %p287 = pneg %p166
        %p288 = pneg %p163
        %s289 = sand.u32 %s153, 1
        %s290 = scalar_lea.sflag [#allocation5], %s289
        %s291 = sand.u32 %s153, 1
        %s292 = smul.addr %s291, 8
        %s293 = scalar_lea.vmem [#allocation9], %s292
        %p294 = scmp.eq.s32.totalorder %s31, 0
        // Predicated region
        $region49: #{tpu_custom_call.1} parent=35 // pred_check
          %p295 = pneg %p294
        $region50: #{tpu_custom_call.1} parent=35 // pred_check_branch
          %297 = sbr.rel (%p295) target = $region52
        $region51: #{tpu_custom_call.1} parent=35 // pred_region
          %298 = vst [vmem:[#allocation2] sm:$0xff] 0.0
        $region52: #{tpu_custom_call.1} parent=35 // pred_fallthru
          _
        %v299 = vld [vmem:[%s251] sm:$0xff]
        %v300 = vld [vmem:[%s260] sm:$0xff]
        %v301 = vld [vmem:[#allocation2] sm:$0xff]
        %vm302 = vcmask 64512
        %v304 = vsel %vm302, %v299, 0
        %306 = vmatprep.subr.mxu0 0.0
        %307 = vmatpush1.msra.mxu0 %v300
        %308 = vmatprep.subr.mxu0 0.0
        %309 = vmatpush1.msra.mxu0 0.0
        %310 = vmatprep.subr.mxu0 0.0
        %311 = vmatpush1.msra.mxu0 0.0
        %312 = vmatprep.subr.mxu0 0.0
        %313 = vmatpush1.msra.mxu0 0.0
        %314 = vmatprep.subr.mxu0 0.0
        %315 = vmatpush1.msra.mxu0 0.0
        %316 = vmatprep.subr.mxu0 0.0
        %317 = vmatpush1.msra.mxu0 0.0
        %318 = vmatprep.subr.mxu0 0.0
        %319 = vmatpush1.msra.mxu0 0.0
        %320 = vmatprep.subr.mxu0 0.0
        %321 = vmatpush1.msra.mxu0 0.0
        %322 = vmatprep.subr.mxu0 0.0
        %323 = vmatpush1.msra.mxu0 0.0
        %324 = vmatprep.subr.mxu0 0.0
        %325 = vmatpush1.msra.mxu0 0.0
        %326 = vmatprep.subr.mxu0 0.0
        %327 = vmatpush1.msra.mxu0 0.0
        %328 = vmatprep.subr.mxu0 0.0
        %329 = vmatpush1.msra.mxu0 0.0
        %330 = vmatprep.subr.mxu0 0.0
        %331 = vmatpush1.msra.mxu0 0.0
        %332 = vmatprep.subr.mxu0 0.0
        %333 = vmatpush1.msra.mxu0 0.0
        %334 = vmatprep.subr.mxu0 0.0
        %335 = vmatpush1.msra.mxu0 0.0
        %336 = vmatprep.subr.mxu0 0.0
        %337 = vmatpush1.msra.mxu0 0.0
        %338 = vmatprep.subr.mxu0 0.0
        %339 = vmatpush1.msra.mxu0 0.0
        %340 = vmatprep.subr.mxu0 0.0
        %341 = vmatpush1.msra.mxu0 0.0
        %342 = vmatprep.subr.mxu0 0.0
        %343 = vmatpush1.msra.mxu0 0.0
        %344 = vmatprep.subr.mxu0 0.0
        %345 = vmatpush1.msra.mxu0 0.0
        %346 = vmatprep.subr.mxu0 0.0
        %347 = vmatpush1.msra.mxu0 0.0
        %348 = vmatprep.subr.mxu0 0.0
        %349 = vmatpush1.msra.mxu0 0.0
        %350 = vmatprep.subr.mxu0 0.0
        %351 = vmatpush1.msra.mxu0 0.0
        %352 = vmatprep.subr.mxu0 0.0
        %353 = vmatpush1.msra.mxu0 0.0
        %354 = vmatprep.subr.mxu0 0.0
        %355 = vmatpush1.msra.mxu0 0.0
        %356 = vmatprep.subr.mxu0 0.0
        %357 = vmatpush1.msra.mxu0 0.0
        %358 = vmatprep.subr.mxu0 0.0
        %359 = vmatpush1.msra.mxu0 0.0
        %360 = vmatprep.subr.mxu0 0.0
        %361 = vmatpush1.msra.mxu0 0.0
        %362 = vmatprep.subr.mxu0 0.0
        %363 = vmatpush1.msra.mxu0 0.0
        %364 = vmatprep.subr.mxu0 0.0
        %365 = vmatpush1.msra.mxu0 0.0
        %366 = vmatprep.subr.mxu0 0.0
        %367 = vmatpush1.msra.mxu0 0.0
        %368 = vmatprep.subr.mxu0 0.0
        %369 = vmatpush1.msra.mxu0 0.0
        %370 = vmatprep.mubr.f32.mxu0 0.0
        %371 = vmatmul.mubr.f32.gmra.mrb[0].mxu0 %v304
        %v372 = vpop.f32.mrb[0].mxu0
        %v373 = vadd.f32 0.0, %v372
        %v374 = vpop.f32.mrb[0].mxu0
        %375 = vdwg.mxu0
        %v376 = vadd.f32 %v301, %v373
        %377 = vst [vmem:[#allocation2] sm:$0xff] %v376
        // Predicated region
        $region53: #{tpu_custom_call.1} parent=35 // pred_check
          %p378 = pneg %p294
        $region54: #{tpu_custom_call.1} parent=35 // pred_check_branch
          %380 = sbr.rel (%p378) target = $region56
        $region55: #{tpu_custom_call.1} parent=35 // pred_region
          %v381 = vld [vmem:[#allocation2] sm:$0xff]
          %v382 = vrcp.pop %v381
          %v383 = vmul.f32 1.0, %v382
          %385 = vset.pattern.permute.xlu0 16
          %386 = vperm.xlu0 %385, %v383
          %v387 = vpop.permute.xlu0 %386
          %v389 = vmul.f32 %v381, %v387
          %v390 = vld [vmem:[#allocation8] sm:$0xff]
          %v391 = vld [vmem:[#allocation8 + $0x8] sm:$0xff]
          %v392 = vld [vmem:[#allocation8 + $0x10] sm:$0xff]
          %v393 = vld [vmem:[#allocation8 + $0x18] sm:$0xff]
          %v394 = vld [vmem:[#allocation8 + $0x20] sm:$0xff]
          %v395 = vld [vmem:[#allocation8 + $0x28] sm:$0xff]
          %v396 = vld [vmem:[#allocation8 + $0x30] sm:$0xff]
          %v397 = vld [vmem:[#allocation8 + $0x38] sm:$0xff]
          %v398 = vld [vmem:[#allocation8 + $0x40] sm:$0xff]
          %v399 = vld [vmem:[#allocation8 + $0x48] sm:$0xff]
          %v400 = vld [vmem:[#allocation8 + $0x50] sm:$0xff]
          %v401 = vld [vmem:[#allocation8 + $0x58] sm:$0xff]
          %v402 = vld [vmem:[#allocation8 + $0x60] sm:$0xff]
          %v403 = vld [vmem:[#allocation8 + $0x68] sm:$0xff]
          %v404 = vld [vmem:[#allocation8 + $0x70] sm:$0xff]
          %v405 = vld [vmem:[#allocation8 + $0x78] sm:$0xff]
          %v406 = vld [vmem:[%s3] sm:$0x1]
          %v408 = vlaneseq
          %v409 = vshrl.u32 %v408, 7
          %v410 = vsub.s32 0, %v409
          %v411 = vrot.slane %v406, %v410
          %413 = vmatprep.subr.mxu0 0.0
          %414 = vmatpush1.msra.mxu0 %v390
          %415 = vmatprep.subr.mxu0 0.0
          %416 = vmatpush1.msra.mxu0 %v391
          %417 = vmatprep.subr.mxu0 0.0
          %418 = vmatpush1.msra.mxu0 %v392
          %419 = vmatprep.subr.mxu0 0.0
          %420 = vmatpush1.msra.mxu0 %v393
          %421 = vmatprep.subr.mxu0 0.0
          %422 = vmatpush1.msra.mxu0 %v394
          %423 = vmatprep.subr.mxu0 0.0
          %424 = vmatpush1.msra.mxu0 %v395
          %425 = vmatprep.subr.mxu0 0.0
          %426 = vmatpush1.msra.mxu0 %v396
          %427 = vmatprep.subr.mxu0 0.0
          %428 = vmatpush1.msra.mxu0 %v397
          %429 = vmatprep.subr.mxu0 0.0
          %430 = vmatpush1.msra.mxu0 %v398
          %431 = vmatprep.subr.mxu0 0.0
          %432 = vmatpush1.msra.mxu0 %v399
          %433 = vmatprep.subr.mxu0 0.0
          %434 = vmatpush1.msra.mxu0 %v400
          %435 = vmatprep.subr.mxu0 0.0
          %436 = vmatpush1.msra.mxu0 %v401
          %437 = vmatprep.subr.mxu0 0.0
          %438 = vmatpush1.msra.mxu0 %v402
          %439 = vmatprep.subr.mxu0 0.0
          %440 = vmatpush1.msra.mxu0 %v403
          %441 = vmatprep.subr.mxu0 0.0
          %442 = vmatpush1.msra.mxu0 %v404
          %443 = vmatprep.subr.mxu0 0.0
          %444 = vmatpush1.msra.mxu0 %v405
          %445 = vmatprep.subr.mxu0 0.0
          %446 = vmatpush1.msra.mxu0 0.0
          %447 = vmatprep.subr.mxu0 0.0
          %448 = vmatpush1.msra.mxu0 0.0
          %449 = vmatprep.subr.mxu0 0.0
          %450 = vmatpush1.msra.mxu0 0.0
          %451 = vmatprep.subr.mxu0 0.0
          %452 = vmatpush1.msra.mxu0 0.0
          %453 = vmatprep.subr.mxu0 0.0
          %454 = vmatpush1.msra.mxu0 0.0
          %455 = vmatprep.subr.mxu0 0.0
          %456 = vmatpush1.msra.mxu0 0.0
          %457 = vmatprep.subr.mxu0 0.0
          %458 = vmatpush1.msra.mxu0 0.0
          %459 = vmatprep.subr.mxu0 0.0
          %460 = vmatpush1.msra.mxu0 0.0
          %461 = vmatprep.subr.mxu0 0.0
          %462 = vmatpush1.msra.mxu0 0.0
          %463 = vmatprep.subr.mxu0 0.0
          %464 = vmatpush1.msra.mxu0 0.0
          %465 = vmatprep.subr.mxu0 0.0
          %466 = vmatpush1.msra.mxu0 0.0
          %467 = vmatprep.subr.mxu0 0.0
          %468 = vmatpush1.msra.mxu0 0.0
          %469 = vmatprep.subr.mxu0 0.0
          %470 = vmatpush1.msra.mxu0 0.0
          %471 = vmatprep.subr.mxu0 0.0
          %472 = vmatpush1.msra.mxu0 0.0
          %473 = vmatprep.subr.mxu0 0.0
          %474 = vmatpush1.msra.mxu0 0.0
          %475 = vmatprep.subr.mxu0 0.0
          %476 = vmatpush1.msra.mxu0 0.0
          %477 = vmatprep.mubr.f32.mxu0 0.0
          %478 = vmatmul.mubr.f32.gmra.mrb[0].mxu0 %v389
          %v479 = vpop.f32.mrb[0].mxu0
          %v480 = vadd.f32 %v411, %v479
          %v481 = vpop.f32.mrb[0].mxu0
          %482 = vdwg.mxu0
          %483 = vst [vmem:[%s293] sm:$0xff] %v480
        $region56: #{tpu_custom_call.1} parent=35 // pred_fallthru
          _
        %s484 = sand.u32 %s153, 1
        %s485 = scalar_lea.sflag [#allocation5], %s484
        %s486 = sand.u32 %s153, 1
        %s487 = smul.addr %s486, 8
        %s488 = scalar_lea.vmem [#allocation9], %s487
        // Predicated region
        $region57: #{tpu_custom_call.1} parent=35 // pred_check
          %p489 = pneg %p163
        $region58: #{tpu_custom_call.1} parent=35 // pred_check_branch
          %491 = sbr.rel (%p489) target = $region60
        $region59: #{tpu_custom_call.1} parent=35 // pred_region
          %s493 = ssub.s32 128, 128
          %494 = vsyncadd %s485, %s493
          %s495 = sadd.s32 %s30, %s29
          %s496 = smul.addr %s495, 128
          %s497 = scalar_lea.hbm %s4, %s496
          %s499 = sshll.u32 %s488, 4
          %s500 = int_to_ptr.vmem [resolvable:$true] %s499
          %502 = dma.vmem_to_hbm [thread:$0]  %s500, 128, %s497, %s485
        $region60: #{tpu_custom_call.1} parent=35 // pred_fallthru
          _
      $region36: #{tpu_custom_call.1} parent=5 // pred_fallthru
        _
      %p503 = scmp.le.s32.totalorder 2, %s19
      // Predicated region
      $region61: #{tpu_custom_call.1} parent=5 // pred_check
        %p504 = pneg %p503
      $region62: #{tpu_custom_call.1} parent=5 // pred_check_branch
        %506 = sbr.rel (%p504) target = $region64
      $region63: #{tpu_custom_call.1} parent=5 // pred_region
        %s507 = ssub.s32 %s19, 2
        // Predicated region
        $region65: #{tpu_custom_call.1} parent=63 // pred_check
          %p508 = pneg %p169
        $region66: #{tpu_custom_call.1} parent=63 // pred_check_branch
          %510 = sbr.rel (%p508) target = $region68
        $region67: #{tpu_custom_call.1} parent=63 // pred_region
          %s511 = sand.u32 %s154, 1
          %s512 = scalar_lea.sflag [#allocation5], %s511
          %s513 = sand.u32 %s154, 1
          %s514 = smul.addr %s513, 8
          %s515 = scalar_lea.vmem [#allocation9], %s514
          %516 = dma.done %s512, 128
        $region68: #{tpu_custom_call.1} parent=63 // pred_fallthru
          _
      $region64: #{tpu_custom_call.1} parent=5 // pred_fallthru
        _
    $region6: #{tpu_custom_call.1} parent=1 // loop_footer
      %s23 = sadd.s32 1, %s19
    $region7: #{tpu_custom_call.1} parent=1 // loop_footer_branch
      %18 = sbr.rel target = $region3
    $region8: #{tpu_custom_call.1} parent=1 // loop_exit
      _
    %517 = vsyncpa [#allocation4], 1
    %s518 = scalar_lea.sflag [#allocation4], 1
    %519 = vsyncpa %s518, 1
    %520 = vsyncpa [#allocation7], 1
    %s521 = scalar_lea.sflag [#allocation7], 1
    %522 = vsyncpa %s521, 1
    %523 = vsyncpa [#allocation5], 1
    %s524 = scalar_lea.sflag [#allocation5], 1
    %525 = vsyncpa %s524, 1

</llo_original>
